<compile_context>
chip_gen: v7x
topology: tpu7x:2x2x1
jax: 0.10.0
libtpu: 0.0.40
codegen_flags: <defaults>
</compile_context>

<pallas_src>
import functools

import jax
import jax.numpy as jnp
from jax.experimental import pallas as pl
from jax.experimental.pallas import tpu as pltpu


def _elu(x):
    # ELU(alpha=1): x if x > 0 else exp(x) - 1   (clamp exp arg to avoid overflow)
    return jnp.where(x > 0, x, jnp.exp(jnp.minimum(x, 0.0)) - 1.0)


def multimer_mlp_kernel(
    x_ref,
    w1_ref, b1_ref,
    w2_ref, b2_ref,
    w3_ref, b3_ref,
    w4_ref, b4_ref,
    w5_ref, b5_ref,
    out_ref,
):
    # BatchNorm1d (eval) is pre-folded into (w1, b1) on the host.
    # fc1 + ELU   (dropout1 == identity in eval)
    h = jnp.dot(x_ref[...], w1_ref[...], preferred_element_type=jnp.float32) + b1_ref[...]
    h = _elu(h)
    # fc2 + ELU   (dropout2 == identity in eval)
    h = jnp.dot(h, w2_ref[...], preferred_element_type=jnp.float32) + b2_ref[...]
    h = _elu(h)
    # fc3 + ELU
    h = jnp.dot(h, w3_ref[...], preferred_element_type=jnp.float32) + b3_ref[...]
    h = _elu(h)
    # fc4 + ELU
    h = jnp.dot(h, w4_ref[...], preferred_element_type=jnp.float32) + b4_ref[...]
    h = _elu(h)
    # fc5 (state dim lane-padded to 128; padded columns carry -1e30 bias)
    logits = jnp.dot(h, w5_ref[...], preferred_element_type=jnp.float32) + b5_ref[...]

    # Softmax over the (padded) state dim; padded lanes contribute exp(-huge) = 0.
    z = logits - jnp.max(logits, axis=-1, keepdims=True)
    e = jnp.exp(z)
    out_ref[...] = e * pl.reciprocal(jnp.sum(e, axis=-1, keepdims=True), approx=True)


def _full_spec(shape):
    # Whole-array block, replicated across the row-tile grid.
    return pl.BlockSpec(shape, lambda i: (0,) * len(shape))


@functools.partial(jax.jit, static_argnames=("multimer", "n_states", "tm"))
def multimer_net_forward(x, params, *, multimer, n_states, tm=512):
    """x: (batch, data_shape) float32 -> (batch, n_states * multimer) float32."""
    batch, data_shape = x.shape
    nf = data_shape // multimer
    M = batch * multimer

    (bn_scale, bn_shift,
     w1, b1, w2, b2, w3, b3, w4, b4, w5, b5) = params

    # ---- Fold eval-mode BatchNorm into fc1 (numerically exact) --------------
    w1f = bn_scale.reshape(nf, 1) * w1            # (nf, 200)
    b1f = bn_shift.reshape(1, nf) @ w1 + b1       # (1, 200)

    # ---- Lane-dense output: pad state dim up to a multiple of 128 lanes -----
    ns_pad = max(128, ((n_states + 127) // 128) * 128)
    w5p = jnp.zeros((w5.shape[0], ns_pad), w5.dtype).at[:, :n_states].set(w5)
    b5p = jnp.full((1, ns_pad), -1e30, b5.dtype).at[:, :n_states].set(b5)

    # ---- Row layout: per-row network -> process rows in (batch, multimer)
    #      order directly; input/output permutes reduce to pure reshapes. ------
    x_rows = x.reshape(M, nf)

    # ---- Row tiling: one grid step for small M, large tiles otherwise -------
    if M <= tm:
        tile = max(8, ((M + 7) // 8) * 8)
    else:
        tile = tm
    M_pad = ((M + tile - 1) // tile) * tile
    if M_pad != M:
        x_rows = jnp.zeros((M_pad, nf), x.dtype).at[:M].set(x_rows)
    grid = (M_pad // tile,)

    # ---- Advisory cost estimate for the XLA scheduler ------------------------
    flops = 2 * M_pad * (nf * 200 + 200 * 100 + 100 * 50 + 50 * 20 + 20 * ns_pad)
    transcendentals = M_pad * (200 + 100 + 50 + 20 + ns_pad)
    weight_bytes = 4 * (nf * 200 + 200 + 200 * 100 + 100 + 100 * 50 + 50
                        + 50 * 20 + 20 + 20 * ns_pad + ns_pad)
    bytes_accessed = 4 * (M_pad * nf + M_pad * ns_pad) + weight_bytes

    y = pl.pallas_call(
        multimer_mlp_kernel,
        out_shape=jax.ShapeDtypeStruct((M_pad, ns_pad), jnp.float32),
        grid_spec=pltpu.PrefetchScalarGridSpec(
            num_scalar_prefetch=0,
            grid=grid,
            in_specs=[
                pl.BlockSpec((tile, nf), lambda i: (i, 0)),     # activation rows
                _full_spec(w1f.shape), _full_spec(b1f.shape),
                _full_spec(w2.shape), _full_spec(b2.shape),
                _full_spec(w3.shape), _full_spec(b3.shape),
                _full_spec(w4.shape), _full_spec(b4.shape),
                _full_spec(w5p.shape), _full_spec(b5p.shape),
            ],
            out_specs=pl.BlockSpec((tile, ns_pad), lambda i: (i, 0)),
        ),
        compiler_params=pltpu.CompilerParams(
            dimension_semantics=("parallel",),
        ),
        cost_estimate=pl.CostEstimate(
            flops=flops,
            transcendentals=transcendentals,
            bytes_accessed=bytes_accessed,
        ),
    )(x_rows, w1f, b1f, w2, b2, w3, b3, w4, b4, w5p, b5p)

    # Rows are (b, m)-ordered, so out[b, m*n_states + s] = y[b*multimer + m, s],
    # exactly matching the reference permute/reshape — no transpose needed.
    out = y[:M, :n_states].reshape(batch, multimer * n_states)
    return out


def multimer_net_reference(x, params, *, multimer, n_states):
    """Pure-JAX mirror of the PyTorch forward (eval mode) for verification."""
    batch, data_shape = x.shape
    nf = data_shape // multimer
    (bn_scale, bn_shift, w1, b1, w2, b2, w3, b3, w4, b4, w5, b5) = params
    x_stack = x.reshape(batch, multimer, nf).transpose(1, 0, 2).reshape(batch * multimer, nf)
    h = x_stack * bn_scale + bn_shift
    h = _elu(h @ w1 + b1)
    h = _elu(h @ w2 + b2)
    h = _elu(h @ w3 + b3)
    h = _elu(h @ w4 + b4)
    p = jax.nn.softmax(h @ w5 + b5, axis=-1)
    return p.reshape(multimer, batch, n_states).transpose(1, 0, 2).reshape(
        batch, n_states * multimer)


def init_params(key, nf, n_states):
    """Deterministic parameter init mimicking PyTorch defaults (shapes from __init__)."""
    dims = [(nf, 200), (200, 100), (100, 50), (50, 20), (20, n_states)]
    params = []

    # BatchNorm1d(nf): gamma=1, beta=0, running_mean=0, running_var=1, eps=1e-5
    eps = 1e-5
    gamma = jnp.ones((nf,), jnp.float32)
    beta = jnp.zeros((nf,), jnp.float32)
    running_mean = jnp.zeros((nf,), jnp.float32)
    running_var = jnp.ones((nf,), jnp.float32)
    scale = gamma / jnp.sqrt(running_var + eps)
    shift = beta - running_mean * scale
    params += [scale.reshape(1, nf), shift.reshape(1, nf)]

    for fan_in, fan_out in dims:
        kw, kb, key = jax.random.split(key, 3)
        bound = 1.0 / jnp.sqrt(jnp.float32(fan_in))
        # weight stored as (in, out) so the kernel does x @ W directly
        w = jax.random.uniform(kw, (fan_in, fan_out), jnp.float32, -bound, bound)
        b = jax.random.uniform(kb, (1, fan_out), jnp.float32, -bound, bound)
        params += [w, b]
    return tuple(params)


if __name__ == "__main__":
    # Shapes consistent with the module:
    #   data_shape = 64, multimer = 4  =>  n_feat_per_sub = 16;  n_states = 5
    batch = 16
    multimer = 4
    n_feat_per_sub = 16
    data_shape = multimer * n_feat_per_sub
    n_states = 5

    key = jax.random.PRNGKey(0)
    kx, kp = jax.random.split(key)
    x = jax.random.normal(kx, (batch, data_shape), jnp.float32)
    params = init_params(kp, n_feat_per_sub, n_states)

    out = multimer_net_forward(x, params, multimer=multimer, n_states=n_states)
    out = jax.block_until_ready(out)

    assert out.shape == (batch, n_states * multimer), out.shape

    # Verify against pure-JAX reference (includes the permute/interleave ordering).
    ref = multimer_net_reference(x, params, multimer=multimer, n_states=n_states)
    max_err = float(jnp.max(jnp.abs(out - ref)))
    assert max_err < 1e-2, f"max abs error vs reference: {max_err}"

    # Each (multimer-block) softmax row sums to ~1 (approx reciprocal tolerance).
    row_sums = out.reshape(batch, multimer, n_states).sum(-1)
    assert jnp.allclose(row_sums, 1.0, atol=1e-2)

    print("KERNEL_OK")
</pallas_src>

<mosaic_0001>
module attributes {stable_mosaic.version = 11 : i64} {
  func.func @multimer_mlp_kernel(%arg0: i32, %arg1: memref<64x16xf32, #tpu.memory_space<vmem>>, %arg2: memref<16x200xf32, #tpu.memory_space<vmem>>, %arg3: memref<1x200xf32, #tpu.memory_space<vmem>>, %arg4: memref<200x100xf32, #tpu.memory_space<vmem>>, %arg5: memref<1x100xf32, #tpu.memory_space<vmem>>, %arg6: memref<100x50xf32, #tpu.memory_space<vmem>>, %arg7: memref<1x50xf32, #tpu.memory_space<vmem>>, %arg8: memref<50x20xf32, #tpu.memory_space<vmem>>, %arg9: memref<1x20xf32, #tpu.memory_space<vmem>>, %arg10: memref<20x128xf32, #tpu.memory_space<vmem>>, %arg11: memref<1x128xf32, #tpu.memory_space<vmem>>, %arg12: memref<64x128xf32, #tpu.memory_space<vmem>>) attributes {dimension_semantics = [#tpu.dimension_semantics<parallel>], iteration_bounds = array<i64: 1>, scalar_prefetch = 0 : i64, scratch_operands = 0 : i64, tpu.core_type = #tpu.core_type<tc>, window_params = [{transform_indices = @transform_0, window_bounds = array<i64: 64, 16>}, {pipeline_mode = #tpu.pipeline_mode<synchronous>, transform_indices = @transform_1, window_bounds = array<i64: 16, 200>}, {pipeline_mode = #tpu.pipeline_mode<synchronous>, transform_indices = @transform_2, window_bounds = array<i64: 1, 200>}, {pipeline_mode = #tpu.pipeline_mode<synchronous>, transform_indices = @transform_3, window_bounds = array<i64: 200, 100>}, {pipeline_mode = #tpu.pipeline_mode<synchronous>, transform_indices = @transform_4, window_bounds = array<i64: 1, 100>}, {pipeline_mode = #tpu.pipeline_mode<synchronous>, transform_indices = @transform_5, window_bounds = array<i64: 100, 50>}, {pipeline_mode = #tpu.pipeline_mode<synchronous>, transform_indices = @transform_6, window_bounds = array<i64: 1, 50>}, {pipeline_mode = #tpu.pipeline_mode<synchronous>, transform_indices = @transform_7, window_bounds = array<i64: 50, 20>}, {pipeline_mode = #tpu.pipeline_mode<synchronous>, transform_indices = @transform_8, window_bounds = array<i64: 1, 20>}, {pipeline_mode = #tpu.pipeline_mode<synchronous>, transform_indices = @transform_9, window_bounds = array<i64: 20, 128>}, {pipeline_mode = #tpu.pipeline_mode<synchronous>, transform_indices = @transform_10, window_bounds = array<i64: 1, 128>}, {transform_indices = @transform_11, window_bounds = array<i64: 64, 128>}]} {
    %c0 = arith.constant 0 : index
    %c0_0 = arith.constant 0 : index
    %0 = vector.load %arg1[%c0, %c0_0] : memref<64x16xf32, #tpu.memory_space<vmem>>, vector<64x16xf32>
    %c0_1 = arith.constant 0 : index
    %c0_2 = arith.constant 0 : index
    %1 = vector.load %arg2[%c0_1, %c0_2] : memref<16x200xf32, #tpu.memory_space<vmem>>, vector<16x200xf32>
    %cst = arith.constant dense<0.000000e+00> : vector<64x200xf32>
    %2 = tpu.matmul %0, %1, %cst {dimension_numbers = #tpu.dot_dimension_numbers<[1], [0], [0], [1], [0, 0, 1, 1], [], []>} : vector<64x16xf32>, vector<16x200xf32>, vector<64x200xf32> -> vector<64x200xf32>
    %c0_3 = arith.constant 0 : index
    %c0_4 = arith.constant 0 : index
    %3 = vector.load %arg3[%c0_3, %c0_4] : memref<1x200xf32, #tpu.memory_space<vmem>>, vector<1x200xf32>
    %4 = vector.broadcast %3 : vector<1x200xf32> to vector<64x200xf32>
    %5 = arith.addf %2, %4 : vector<64x200xf32>
    %cst_5 = arith.constant 0.000000e+00 : f32
    %6 = vector.broadcast %cst_5 : f32 to vector<64x200xf32>
    %7 = arith.cmpf ogt, %5, %6 : vector<64x200xf32>
    %cst_6 = arith.constant 0.000000e+00 : f32
    %8 = vector.broadcast %cst_6 : f32 to vector<64x200xf32>
    %9 = arith.minimumf %5, %8 : vector<64x200xf32>
    %10 = math.exp %9 : vector<64x200xf32>
    %cst_7 = arith.constant 1.000000e+00 : f32
    %11 = vector.broadcast %cst_7 : f32 to vector<64x200xf32>
    %12 = arith.subf %10, %11 : vector<64x200xf32>
    %13 = arith.select %7, %5, %12 : vector<64x200xi1>, vector<64x200xf32>
    %c0_8 = arith.constant 0 : index
    %c0_9 = arith.constant 0 : index
    %14 = vector.load %arg4[%c0_8, %c0_9] : memref<200x100xf32, #tpu.memory_space<vmem>>, vector<200x100xf32>
    %cst_10 = arith.constant dense<0.000000e+00> : vector<64x100xf32>
    %15 = tpu.matmul %13, %14, %cst_10 {dimension_numbers = #tpu.dot_dimension_numbers<[1], [0], [0], [1], [0, 0, 1, 1], [], []>} : vector<64x200xf32>, vector<200x100xf32>, vector<64x100xf32> -> vector<64x100xf32>
    %c0_11 = arith.constant 0 : index
    %c0_12 = arith.constant 0 : index
    %16 = vector.load %arg5[%c0_11, %c0_12] : memref<1x100xf32, #tpu.memory_space<vmem>>, vector<1x100xf32>
    %17 = vector.broadcast %16 : vector<1x100xf32> to vector<64x100xf32>
    %18 = arith.addf %15, %17 : vector<64x100xf32>
    %cst_13 = arith.constant 0.000000e+00 : f32
    %19 = vector.broadcast %cst_13 : f32 to vector<64x100xf32>
    %20 = arith.cmpf ogt, %18, %19 : vector<64x100xf32>
    %cst_14 = arith.constant 0.000000e+00 : f32
    %21 = vector.broadcast %cst_14 : f32 to vector<64x100xf32>
    %22 = arith.minimumf %18, %21 : vector<64x100xf32>
    %23 = math.exp %22 : vector<64x100xf32>
    %cst_15 = arith.constant 1.000000e+00 : f32
    %24 = vector.broadcast %cst_15 : f32 to vector<64x100xf32>
    %25 = arith.subf %23, %24 : vector<64x100xf32>
    %26 = arith.select %20, %18, %25 : vector<64x100xi1>, vector<64x100xf32>
    %c0_16 = arith.constant 0 : index
    %c0_17 = arith.constant 0 : index
    %27 = vector.load %arg6[%c0_16, %c0_17] : memref<100x50xf32, #tpu.memory_space<vmem>>, vector<100x50xf32>
    %cst_18 = arith.constant dense<0.000000e+00> : vector<64x50xf32>
    %28 = tpu.matmul %26, %27, %cst_18 {dimension_numbers = #tpu.dot_dimension_numbers<[1], [0], [0], [1], [0, 0, 1, 1], [], []>} : vector<64x100xf32>, vector<100x50xf32>, vector<64x50xf32> -> vector<64x50xf32>
    %c0_19 = arith.constant 0 : index
    %c0_20 = arith.constant 0 : index
    %29 = vector.load %arg7[%c0_19, %c0_20] : memref<1x50xf32, #tpu.memory_space<vmem>>, vector<1x50xf32>
    %30 = vector.broadcast %29 : vector<1x50xf32> to vector<64x50xf32>
    %31 = arith.addf %28, %30 : vector<64x50xf32>
    %cst_21 = arith.constant 0.000000e+00 : f32
    %32 = vector.broadcast %cst_21 : f32 to vector<64x50xf32>
    %33 = arith.cmpf ogt, %31, %32 : vector<64x50xf32>
    %cst_22 = arith.constant 0.000000e+00 : f32
    %34 = vector.broadcast %cst_22 : f32 to vector<64x50xf32>
    %35 = arith.minimumf %31, %34 : vector<64x50xf32>
    %36 = math.exp %35 : vector<64x50xf32>
    %cst_23 = arith.constant 1.000000e+00 : f32
    %37 = vector.broadcast %cst_23 : f32 to vector<64x50xf32>
    %38 = arith.subf %36, %37 : vector<64x50xf32>
    %39 = arith.select %33, %31, %38 : vector<64x50xi1>, vector<64x50xf32>
    %c0_24 = arith.constant 0 : index
    %c0_25 = arith.constant 0 : index
    %40 = vector.load %arg8[%c0_24, %c0_25] : memref<50x20xf32, #tpu.memory_space<vmem>>, vector<50x20xf32>
    %cst_26 = arith.constant dense<0.000000e+00> : vector<64x20xf32>
    %41 = tpu.matmul %39, %40, %cst_26 {dimension_numbers = #tpu.dot_dimension_numbers<[1], [0], [0], [1], [0, 0, 1, 1], [], []>} : vector<64x50xf32>, vector<50x20xf32>, vector<64x20xf32> -> vector<64x20xf32>
    %c0_27 = arith.constant 0 : index
    %c0_28 = arith.constant 0 : index
    %42 = vector.load %arg9[%c0_27, %c0_28] : memref<1x20xf32, #tpu.memory_space<vmem>>, vector<1x20xf32>
    %43 = vector.broadcast %42 : vector<1x20xf32> to vector<64x20xf32>
    %44 = arith.addf %41, %43 : vector<64x20xf32>
    %cst_29 = arith.constant 0.000000e+00 : f32
    %45 = vector.broadcast %cst_29 : f32 to vector<64x20xf32>
    %46 = arith.cmpf ogt, %44, %45 : vector<64x20xf32>
    %cst_30 = arith.constant 0.000000e+00 : f32
    %47 = vector.broadcast %cst_30 : f32 to vector<64x20xf32>
    %48 = arith.minimumf %44, %47 : vector<64x20xf32>
    %49 = math.exp %48 : vector<64x20xf32>
    %cst_31 = arith.constant 1.000000e+00 : f32
    %50 = vector.broadcast %cst_31 : f32 to vector<64x20xf32>
    %51 = arith.subf %49, %50 : vector<64x20xf32>
    %52 = arith.select %46, %44, %51 : vector<64x20xi1>, vector<64x20xf32>
    %c0_32 = arith.constant 0 : index
    %c0_33 = arith.constant 0 : index
    %53 = vector.load %arg10[%c0_32, %c0_33] : memref<20x128xf32, #tpu.memory_space<vmem>>, vector<20x128xf32>
    %cst_34 = arith.constant dense<0.000000e+00> : vector<64x128xf32>
    %54 = tpu.matmul %52, %53, %cst_34 {dimension_numbers = #tpu.dot_dimension_numbers<[1], [0], [0], [1], [0, 0, 1, 1], [], []>} : vector<64x20xf32>, vector<20x128xf32>, vector<64x128xf32> -> vector<64x128xf32>
    %c0_35 = arith.constant 0 : index
    %c0_36 = arith.constant 0 : index
    %55 = vector.load %arg11[%c0_35, %c0_36] : memref<1x128xf32, #tpu.memory_space<vmem>>, vector<1x128xf32>
    %56 = vector.broadcast %55 : vector<1x128xf32> to vector<64x128xf32>
    %57 = arith.addf %54, %56 : vector<64x128xf32>
    %cst_37 = arith.constant dense<0xFF800000> : vector<64xf32>
    %58 = vector.multi_reduction <maximumf>, %57, %cst_37 [1] : vector<64x128xf32> to vector<64xf32>
    %59 = vector.shape_cast %58 : vector<64xf32> to vector<64x1xf32>
    %60 = vector.broadcast %59 : vector<64x1xf32> to vector<64x128xf32>
    %61 = arith.subf %57, %60 : vector<64x128xf32>
    %62 = math.exp %61 : vector<64x128xf32>
    %cst_38 = arith.constant dense<0.000000e+00> : vector<64xf32>
    %63 = vector.multi_reduction <add>, %62, %cst_38 [1] : vector<64x128xf32> to vector<64xf32>
    %64 = vector.shape_cast %63 : vector<64xf32> to vector<64x1xf32>
    %65 = tpu.reciprocal %64 {approx = true} : vector<64x1xf32> -> vector<64x1xf32>
    %66 = vector.broadcast %65 : vector<64x1xf32> to vector<64x128xf32>
    %67 = arith.mulf %62, %66 : vector<64x128xf32>
    %c0_39 = arith.constant 0 : index
    %c0_40 = arith.constant 0 : index
    %68 = vector.load %arg12[%c0_39, %c0_40] : memref<64x128xf32, #tpu.memory_space<vmem>>, vector<64x128xf32>
    tpu.vector_store %arg12[%c0_39, %c0_40], %67 {strides = array<i32>} : memref<64x128xf32, #tpu.memory_space<vmem>>, vector<64x128xf32>,
    return
  }
  func.func @transform_0(%arg0: i32) -> (i32, i32) {
    %c0_i32 = arith.constant 0 : i32
    %c0_i32_0 = arith.constant 0 : i32
    return %arg0, %c0_i32 : i32, i32
  }
  func.func @transform_1(%arg0: i32) -> (i32, i32) {
    %c0_i32 = arith.constant 0 : i32
    %c0_i32_0 = arith.constant 0 : i32
    %c0_i32_1 = arith.constant 0 : i32
    return %c0_i32, %c0_i32_0 : i32, i32
  }
  func.func @transform_2(%arg0: i32) -> (i32, i32) {
    %c0_i32 = arith.constant 0 : i32
    %c0_i32_0 = arith.constant 0 : i32
    %c0_i32_1 = arith.constant 0 : i32
    return %c0_i32, %c0_i32_0 : i32, i32
  }
  func.func @transform_3(%arg0: i32) -> (i32, i32) {
    %c0_i32 = arith.constant 0 : i32
    %c0_i32_0 = arith.constant 0 : i32
    %c0_i32_1 = arith.constant 0 : i32
    return %c0_i32, %c0_i32_0 : i32, i32
  }
  func.func @transform_4(%arg0: i32) -> (i32, i32) {
    %c0_i32 = arith.constant 0 : i32
    %c0_i32_0 = arith.constant 0 : i32
    %c0_i32_1 = arith.constant 0 : i32
    return %c0_i32, %c0_i32_0 : i32, i32
  }
  func.func @transform_5(%arg0: i32) -> (i32, i32) {
    %c0_i32 = arith.constant 0 : i32
    %c0_i32_0 = arith.constant 0 : i32
    %c0_i32_1 = arith.constant 0 : i32
    return %c0_i32, %c0_i32_0 : i32, i32
  }
  func.func @transform_6(%arg0: i32) -> (i32, i32) {
    %c0_i32 = arith.constant 0 : i32
    %c0_i32_0 = arith.constant 0 : i32
    %c0_i32_1 = arith.constant 0 : i32
    return %c0_i32, %c0_i32_0 : i32, i32
  }
  func.func @transform_7(%arg0: i32) -> (i32, i32) {
    %c0_i32 = arith.constant 0 : i32
    %c0_i32_0 = arith.constant 0 : i32
    %c0_i32_1 = arith.constant 0 : i32
    return %c0_i32, %c0_i32_0 : i32, i32
  }
  func.func @transform_8(%arg0: i32) -> (i32, i32) {
    %c0_i32 = arith.constant 0 : i32
    %c0_i32_0 = arith.constant 0 : i32
    %c0_i32_1 = arith.constant 0 : i32
    return %c0_i32, %c0_i32_0 : i32, i32
  }
  func.func @transform_9(%arg0: i32) -> (i32, i32) {
    %c0_i32 = arith.constant 0 : i32
    %c0_i32_0 = arith.constant 0 : i32
    %c0_i32_1 = arith.constant 0 : i32
    return %c0_i32, %c0_i32_0 : i32, i32
  }
  func.func @transform_10(%arg0: i32) -> (i32, i32) {
    %c0_i32 = arith.constant 0 : i32
    %c0_i32_0 = arith.constant 0 : i32
    %c0_i32_1 = arith.constant 0 : i32
    return %c0_i32, %c0_i32_0 : i32, i32
  }
  func.func @transform_11(%arg0: i32) -> (i32, i32) {
    %c0_i32 = arith.constant 0 : i32
    %c0_i32_0 = arith.constant 0 : i32
    return %arg0, %c0_i32 : i32, i32
  }
}

</mosaic_0001>

<llo_original>
// kernel: multimer_net_forward.1
$region0: #{multimer_net_forward.1}
  #allocation0 [shape = 'u32[]', space=smem, size = 0x4, offset = 0x4, fixed_abs, tag = 'smem constant byte address 0x4 - core index']
  #allocation1 [shape = 'u32[144,128]{1,0:T(1,128)}', space=vmem, size = 0x12000, scoped, tag = 'internal scratch']
  %s0 = inlined_call_operand.vmem [shape: f32[64,16], index: 0, kind: input, shape index: {}]
  %s1 = inlined_call_operand.vmem [shape: f32[16,200], index: 1, kind: input, shape index: {}]
  %s2 = inlined_call_operand.vmem [shape: f32[1,200], index: 2, kind: input, shape index: {}]
  %s3 = inlined_call_operand.vmem [shape: f32[200,100], index: 3, kind: input, shape index: {}]
  %s4 = inlined_call_operand.vmem [shape: f32[1,100], index: 4, kind: input, shape index: {}]
  %s5 = inlined_call_operand.vmem [shape: f32[100,50], index: 5, kind: input, shape index: {}]
  %s6 = inlined_call_operand.vmem [shape: f32[1,50], index: 6, kind: input, shape index: {}]
  %s7 = inlined_call_operand.vmem [shape: f32[50,20], index: 7, kind: input, shape index: {}]
  %s8 = inlined_call_operand.vmem [shape: f32[1,20], index: 8, kind: input, shape index: {}]
  %s9 = inlined_call_operand.vmem [shape: f32[20,128], index: 9, kind: input, shape index: {}]
  %s10 = inlined_call_operand.vmem [shape: f32[1,128], index: 10, kind: input, shape index: {}]
  %s11 = inlined_call_operand.vmem [shape: f32[64,128], index: 11, kind: output, shape index: {}]
  %s12 = sld [smem:[#allocation0]]
  $region54: #{multimer_net_forward.1} parent=0
    _
  %s14 = ssub.s32 1, %s12
  %s15 = scalar_select 0, %s14, %s12
  // Predicated region
  $region2: #{multimer_net_forward.1} parent=0 // pred_check
    _
  $region3: #{multimer_net_forward.1} parent=0 // pred_check_branch
    %17 = sbr.rel (0) target = $region5
  $region4: #{multimer_net_forward.1} parent=0 // pred_region
    _
  $region5: #{multimer_net_forward.1} parent=0 // pred_fallthru
    _
  // Predicated region
  $region6: #{multimer_net_forward.1} parent=0 // pred_check
    _
  $region7: #{multimer_net_forward.1} parent=0 // pred_check_branch
    %19 = sbr.rel (0) target = $region9
  $region8: #{multimer_net_forward.1} parent=0 // pred_region
    _
  $region9: #{multimer_net_forward.1} parent=0 // pred_fallthru
    _
  // Predicated region
  $region10: #{multimer_net_forward.1} parent=0 // pred_check
    _
  $region11: #{multimer_net_forward.1} parent=0 // pred_check_branch
    %21 = sbr.rel (0) target = $region13
  $region12: #{multimer_net_forward.1} parent=0 // pred_region
    _
  $region13: #{multimer_net_forward.1} parent=0 // pred_fallthru
    _
  // Predicated region
  $region14: #{multimer_net_forward.1} parent=0 // pred_check
    _
  $region15: #{multimer_net_forward.1} parent=0 // pred_check_branch
    %23 = sbr.rel (0) target = $region17
  $region16: #{multimer_net_forward.1} parent=0 // pred_region
    _
  $region17: #{multimer_net_forward.1} parent=0 // pred_fallthru
    _
  // Predicated region
  $region18: #{multimer_net_forward.1} parent=0 // pred_check
    _
  $region19: #{multimer_net_forward.1} parent=0 // pred_check_branch
    %25 = sbr.rel (0) target = $region21
  $region20: #{multimer_net_forward.1} parent=0 // pred_region
    _
  $region21: #{multimer_net_forward.1} parent=0 // pred_fallthru
    _
  // Predicated region
  $region22: #{multimer_net_forward.1} parent=0 // pred_check
    _
  $region23: #{multimer_net_forward.1} parent=0 // pred_check_branch
    %27 = sbr.rel (0) target = $region25
  $region24: #{multimer_net_forward.1} parent=0 // pred_region
    _
  $region25: #{multimer_net_forward.1} parent=0 // pred_fallthru
    _
  // Predicated region
  $region26: #{multimer_net_forward.1} parent=0 // pred_check
    _
  $region27: #{multimer_net_forward.1} parent=0 // pred_check_branch
    %29 = sbr.rel (0) target = $region29
  $region28: #{multimer_net_forward.1} parent=0 // pred_region
    _
  $region29: #{multimer_net_forward.1} parent=0 // pred_fallthru
    _
  // Predicated region
  $region30: #{multimer_net_forward.1} parent=0 // pred_check
    _
  $region31: #{multimer_net_forward.1} parent=0 // pred_check_branch
    %31 = sbr.rel (0) target = $region33
  $region32: #{multimer_net_forward.1} parent=0 // pred_region
    _
  $region33: #{multimer_net_forward.1} parent=0 // pred_fallthru
    _
  // Predicated region
  $region34: #{multimer_net_forward.1} parent=0 // pred_check
    _
  $region35: #{multimer_net_forward.1} parent=0 // pred_check_branch
    %33 = sbr.rel (0) target = $region37
  $region36: #{multimer_net_forward.1} parent=0 // pred_region
    _
  $region37: #{multimer_net_forward.1} parent=0 // pred_fallthru
    _
  // Predicated region
  $region38: #{multimer_net_forward.1} parent=0 // pred_check
    _
  $region39: #{multimer_net_forward.1} parent=0 // pred_check_branch
    %35 = sbr.rel (0) target = $region41
  $region40: #{multimer_net_forward.1} parent=0 // pred_region
    _
  $region41: #{multimer_net_forward.1} parent=0 // pred_fallthru
    _
  // Predicated region
  $region42: #{multimer_net_forward.1} parent=0 // pred_check
    _
  $region43: #{multimer_net_forward.1} parent=0 // pred_check_branch
    %37 = sbr.rel (0) target = $region45
  $region44: #{multimer_net_forward.1} parent=0 // pred_region
    _
  $region45: #{multimer_net_forward.1} parent=0 // pred_fallthru
    _
  %v38 = vld [vmem:[%s0] sm:$0xff]
  %v39 = vld [vmem:[%s0 + $0x8] sm:$0xff]
  %v40 = vld [vmem:[%s0 + $0x10] sm:$0xff]
  %v41 = vld [vmem:[%s0 + $0x18] sm:$0xff]
  %v42 = vld [vmem:[%s0 + $0x20] sm:$0xff]
  %v43 = vld [vmem:[%s0 + $0x28] sm:$0xff]
  %v44 = vld [vmem:[%s0 + $0x30] sm:$0xff]
  %v45 = vld [vmem:[%s0 + $0x38] sm:$0xff]
  %v46 = vld [vmem:[%s1] sm:$0xff]
  %v47 = vld [vmem:[%s1 + $0x8] sm:$0xff]
  %v48 = vld [vmem:[%s1 + $0x10] sm:$0xff]
  %v49 = vld [vmem:[%s1 + $0x18] sm:$0xff]
  %v50 = vld [vmem:[%s2] sm:$0x3]
  %v52 = vlaneseq
  %v53 = vshrl.u32 %v52, 7
  %v54 = vsub.s32 0, %v53
  %v55 = vrot.slane %v50, %v54
  %v56 = vlaneseq
  %v57 = vshrl.u32 %v56, 7
  %v58 = vsub.s32 1, %v57
  %v59 = vrot.slane %v50, %v58
  %vm62 = vcmask 130048
  %v64 = vsel %vm62, %v38, 0
  %v67 = vsel %vm62, %v39, 0
  %v70 = vsel %vm62, %v40, 0
  %v73 = vsel %vm62, %v41, 0
  %v76 = vsel %vm62, %v42, 0
  %v79 = vsel %vm62, %v43, 0
  %v82 = vsel %vm62, %v44, 0
  %v85 = vsel %vm62, %v45, 0
  %87 = vmatprep.subr.mxu0 %v47
  %88 = vmatpush1.msra.mxu0 %v46
  %89 = vmatprep.subr.mxu0 %v49
  %90 = vmatpush1.msra.mxu0 %v48
  %91 = vmatprep.subr.mxu0 0.0
  %92 = vmatpush1.msra.mxu0 0.0
  %93 = vmatprep.subr.mxu0 0.0
  %94 = vmatpush1.msra.mxu0 0.0
  %95 = vmatprep.subr.mxu0 0.0
  %96 = vmatpush1.msra.mxu0 0.0
  %97 = vmatprep.subr.mxu0 0.0
  %98 = vmatpush1.msra.mxu0 0.0
  %99 = vmatprep.subr.mxu0 0.0
  %100 = vmatpush1.msra.mxu0 0.0
  %101 = vmatprep.subr.mxu0 0.0
  %102 = vmatpush1.msra.mxu0 0.0
  %103 = vmatprep.subr.mxu0 0.0
  %104 = vmatpush1.msra.mxu0 0.0
  %105 = vmatprep.subr.mxu0 0.0
  %106 = vmatpush1.msra.mxu0 0.0
  %107 = vmatprep.subr.mxu0 0.0
  %108 = vmatpush1.msra.mxu0 0.0
  %109 = vmatprep.subr.mxu0 0.0
  %110 = vmatpush1.msra.mxu0 0.0
  %111 = vmatprep.subr.mxu0 0.0
  %112 = vmatpush1.msra.mxu0 0.0
  %113 = vmatprep.subr.mxu0 0.0
  %114 = vmatpush1.msra.mxu0 0.0
  %115 = vmatprep.subr.mxu0 0.0
  %116 = vmatpush1.msra.mxu0 0.0
  %117 = vmatprep.subr.mxu0 0.0
  %118 = vmatpush1.msra.mxu0 0.0
  %119 = vmatprep.subr.mxu0 0.0
  %120 = vmatpush1.msra.mxu0 0.0
  %121 = vmatprep.subr.mxu0 0.0
  %122 = vmatpush1.msra.mxu0 0.0
  %123 = vmatprep.subr.mxu0 0.0
  %124 = vmatpush1.msra.mxu0 0.0
  %125 = vmatprep.subr.mxu0 0.0
  %126 = vmatpush1.msra.mxu0 0.0
  %127 = vmatprep.subr.mxu0 0.0
  %128 = vmatpush1.msra.mxu0 0.0
  %129 = vmatprep.subr.mxu0 0.0
  %130 = vmatpush1.msra.mxu0 0.0
  %131 = vmatprep.subr.mxu0 0.0
  %132 = vmatpush1.msra.mxu0 0.0
  %133 = vmatprep.subr.mxu0 0.0
  %134 = vmatpush1.msra.mxu0 0.0
  %135 = vmatprep.subr.mxu0 0.0
  %136 = vmatpush1.msra.mxu0 0.0
  %137 = vmatprep.subr.mxu0 0.0
  %138 = vmatpush1.msra.mxu0 0.0
  %139 = vmatprep.subr.mxu0 0.0
  %140 = vmatpush1.msra.mxu0 0.0
  %141 = vmatprep.subr.mxu0 0.0
  %142 = vmatpush1.msra.mxu0 0.0
  %143 = vmatprep.subr.mxu0 0.0
  %144 = vmatpush1.msra.mxu0 0.0
  %145 = vmatprep.subr.mxu0 0.0
  %146 = vmatpush1.msra.mxu0 0.0
  %147 = vmatprep.subr.mxu0 0.0
  %148 = vmatpush1.msra.mxu0 0.0
  %149 = vmatprep.subr.mxu0 0.0
  %150 = vmatpush1.msra.mxu0 0.0
  %151 = vmatprep.mubr.f32.mxu0 0.0
  %152 = vmatmul.mubr.f32.gmra.mrb[0].mxu0 %v64
  %v153 = vpop.f32.mrb[0].mxu0
  %v154 = vadd.f32 %v55, %v153
  %v155 = vpop.f32.mrb[0].mxu0
  %v156 = vadd.f32 %v59, %v155
  %157 = vmatprep.mubr.f32.mxu0 0.0
  %158 = vmatmul.mubr.f32.gmra.mrb[0].mxu0 %v67
  %v159 = vpop.f32.mrb[0].mxu0
  %v160 = vadd.f32 %v55, %v159
  %v161 = vpop.f32.mrb[0].mxu0
  %v162 = vadd.f32 %v59, %v161
  %163 = vmatprep.mubr.f32.mxu0 0.0
  %164 = vmatmul.mubr.f32.gmra.mrb[0].mxu0 %v70
  %v165 = vpop.f32.mrb[0].mxu0
  %v166 = vadd.f32 %v55, %v165
  %v167 = vpop.f32.mrb[0].mxu0
  %v168 = vadd.f32 %v59, %v167
  %169 = vmatprep.mubr.f32.mxu0 0.0
  %170 = vmatmul.mubr.f32.gmra.mrb[0].mxu0 %v73
  %v171 = vpop.f32.mrb[0].mxu0
  %v172 = vadd.f32 %v55, %v171
  %v173 = vpop.f32.mrb[0].mxu0
  %v174 = vadd.f32 %v59, %v173
  %175 = vmatprep.mubr.f32.mxu0 0.0
  %176 = vmatmul.mubr.f32.gmra.mrb[0].mxu0 %v76
  %v177 = vpop.f32.mrb[0].mxu0
  %v178 = vadd.f32 %v55, %v177
  %v179 = vpop.f32.mrb[0].mxu0
  %v180 = vadd.f32 %v59, %v179
  %181 = vmatprep.mubr.f32.mxu0 0.0
  %182 = vmatmul.mubr.f32.gmra.mrb[0].mxu0 %v79
  %v183 = vpop.f32.mrb[0].mxu0
  %v184 = vadd.f32 %v55, %v183
  %v185 = vpop.f32.mrb[0].mxu0
  %v186 = vadd.f32 %v59, %v185
  %187 = vmatprep.mubr.f32.mxu0 0.0
  %188 = vmatmul.mubr.f32.gmra.mrb[0].mxu0 %v82
  %v189 = vpop.f32.mrb[0].mxu0
  %v190 = vadd.f32 %v55, %v189
  %v191 = vpop.f32.mrb[0].mxu0
  %v192 = vadd.f32 %v59, %v191
  %193 = vmatprep.mubr.f32.mxu0 0.0
  %194 = vmatmul.mubr.f32.gmra.mrb[0].mxu0 %v85
  %v195 = vpop.f32.mrb[0].mxu0
  %v196 = vadd.f32 %v55, %v195
  %v197 = vpop.f32.mrb[0].mxu0
  %v198 = vadd.f32 %v59, %v197
  %199 = vdwg.mxu0
  %vm200 = vcmp.gt.f32.partialorder %v154, 0.0
  %vm201 = vcmp.gt.f32.partialorder %v156, 0.0
  %vm202 = vcmp.gt.f32.partialorder %v160, 0.0
  %vm203 = vcmp.gt.f32.partialorder %v162, 0.0
  %vm204 = vcmp.gt.f32.partialorder %v166, 0.0
  %vm205 = vcmp.gt.f32.partialorder %v168, 0.0
  %vm206 = vcmp.gt.f32.partialorder %v172, 0.0
  %vm207 = vcmp.gt.f32.partialorder %v174, 0.0
  %vm208 = vcmp.gt.f32.partialorder %v178, 0.0
  %vm209 = vcmp.gt.f32.partialorder %v180, 0.0
  %vm210 = vcmp.gt.f32.partialorder %v184, 0.0
  %vm211 = vcmp.gt.f32.partialorder %v186, 0.0
  %vm212 = vcmp.gt.f32.partialorder %v190, 0.0
  %vm213 = vcmp.gt.f32.partialorder %v192, 0.0
  %vm214 = vcmp.gt.f32.partialorder %v196, 0.0
  %vm215 = vcmp.gt.f32.partialorder %v198, 0.0
  %v216 = vmin.f32 %v154, 0.0
  %v217 = vmin.f32 %v156, 0.0
  %v218 = vmin.f32 %v160, 0.0
  %v219 = vmin.f32 %v162, 0.0
  %v220 = vmin.f32 %v166, 0.0
  %v221 = vmin.f32 %v168, 0.0
  %v222 = vmin.f32 %v172, 0.0
  %v223 = vmin.f32 %v174, 0.0
  %v224 = vmin.f32 %v178, 0.0
  %v225 = vmin.f32 %v180, 0.0
  %v226 = vmin.f32 %v184, 0.0
  %v227 = vmin.f32 %v186, 0.0
  %v228 = vmin.f32 %v190, 0.0
  %v229 = vmin.f32 %v192, 0.0
  %v230 = vmin.f32 %v196, 0.0
  %v231 = vmin.f32 %v198, 0.0
  %v232 = vmul.f32 %v216, 1.442695
  %v233 = vpow.pop %v232
  %v234 = vmul.f32 %v217, 1.442695
  %v235 = vpow.pop %v234
  %v236 = vmul.f32 %v218, 1.442695
  %v237 = vpow.pop %v236
  %v238 = vmul.f32 %v219, 1.442695
  %v239 = vpow.pop %v238
  %v240 = vmul.f32 %v220, 1.442695
  %v241 = vpow.pop %v240
  %v242 = vmul.f32 %v221, 1.442695
  %v243 = vpow.pop %v242
  %v244 = vmul.f32 %v222, 1.442695
  %v245 = vpow.pop %v244
  %v246 = vmul.f32 %v223, 1.442695
  %v247 = vpow.pop %v246
  %v248 = vmul.f32 %v224, 1.442695
  %v249 = vpow.pop %v248
  %v250 = vmul.f32 %v225, 1.442695
  %v251 = vpow.pop %v250
  %v252 = vmul.f32 %v226, 1.442695
  %v253 = vpow.pop %v252
  %v254 = vmul.f32 %v227, 1.442695
  %v255 = vpow.pop %v254
  %v256 = vmul.f32 %v228, 1.442695
  %v257 = vpow.pop %v256
  %v258 = vmul.f32 %v229, 1.442695
  %v259 = vpow.pop %v258
  %v260 = vmul.f32 %v230, 1.442695
  %v261 = vpow.pop %v260
  %v262 = vmul.f32 %v231, 1.442695
  %v263 = vpow.pop %v262
  %v264 = vsub.f32 %v233, 1.0
  %v265 = vsub.f32 %v235, 1.0
  %v266 = vsub.f32 %v237, 1.0
  %v267 = vsub.f32 %v239, 1.0
  %v268 = vsub.f32 %v241, 1.0
  %v269 = vsub.f32 %v243, 1.0
  %v270 = vsub.f32 %v245, 1.0
  %v271 = vsub.f32 %v247, 1.0
  %v272 = vsub.f32 %v249, 1.0
  %v273 = vsub.f32 %v251, 1.0
  %v274 = vsub.f32 %v253, 1.0
  %v275 = vsub.f32 %v255, 1.0
  %v276 = vsub.f32 %v257, 1.0
  %v277 = vsub.f32 %v259, 1.0
  %v278 = vsub.f32 %v261, 1.0
  %v279 = vsub.f32 %v263, 1.0
  %v280 = vsel %vm200, %v154, %v264
  %v281 = vsel %vm201, %v156, %v265
  %v282 = vsel %vm202, %v160, %v266
  %v283 = vsel %vm203, %v162, %v267
  %v284 = vsel %vm204, %v166, %v268
  %v285 = vsel %vm205, %v168, %v269
  %v286 = vsel %vm206, %v172, %v270
  %v287 = vsel %vm207, %v174, %v271
  %v288 = vsel %vm208, %v178, %v272
  %v289 = vsel %vm209, %v180, %v273
  %v290 = vsel %vm210, %v184, %v274
  %v291 = vsel %vm211, %v186, %v275
  %v292 = vsel %vm212, %v190, %v276
  %v293 = vsel %vm213, %v192, %v277
  %v294 = vsel %vm214, %v196, %v278
  %v295 = vsel %vm215, %v198, %v279
  %v296 = vld [vmem:[%s3] sm:$0xff]
  %v297 = vld [vmem:[%s3 + $0x8] sm:$0xff]
  %v298 = vld [vmem:[%s3 + $0x10] sm:$0xff]
  %v299 = vld [vmem:[%s3 + $0x18] sm:$0xff]
  %v300 = vld [vmem:[%s3 + $0x20] sm:$0xff]
  %v301 = vld [vmem:[%s3 + $0x28] sm:$0xff]
  %v302 = vld [vmem:[%s3 + $0x30] sm:$0xff]
  %v303 = vld [vmem:[%s3 + $0x38] sm:$0xff]
  %v304 = vld [vmem:[%s3 + $0x40] sm:$0xff]
  %v305 = vld [vmem:[%s3 + $0x48] sm:$0xff]
  %v306 = vld [vmem:[%s3 + $0x50] sm:$0xff]
  %v307 = vld [vmem:[%s3 + $0x58] sm:$0xff]
  %v308 = vld [vmem:[%s3 + $0x60] sm:$0xff]
  %v309 = vld [vmem:[%s3 + $0x68] sm:$0xff]
  %v310 = vld [vmem:[%s3 + $0x70] sm:$0xff]
  %v311 = vld [vmem:[%s3 + $0x78] sm:$0xff]
  %v312 = vld [vmem:[%s3 + $0x80] sm:$0xff]
  %v313 = vld [vmem:[%s3 + $0x88] sm:$0xff]
  %v314 = vld [vmem:[%s3 + $0x90] sm:$0xff]
  %v315 = vld [vmem:[%s3 + $0x98] sm:$0xff]
  %v316 = vld [vmem:[%s3 + $0xa0] sm:$0xff]
  %v317 = vld [vmem:[%s3 + $0xa8] sm:$0xff]
  %v318 = vld [vmem:[%s3 + $0xb0] sm:$0xff]
  %v319 = vld [vmem:[%s3 + $0xb8] sm:$0xff]
  %v320 = vld [vmem:[%s3 + $0xc0] sm:$0xff]
  %v321 = vld [vmem:[%s4] sm:$0x1]
  %v323 = vlaneseq
  %v324 = vshrl.u32 %v323, 7
  %v325 = vsub.s32 0, %v324
  %v326 = vrot.slane %v321, %v325
  %vm328 = vcmask 588800
  %v330 = vsel %vm328, %v281, 0
  %v333 = vsel %vm328, %v283, 0
  %v336 = vsel %vm328, %v285, 0
  %v339 = vsel %vm328, %v287, 0
  %v342 = vsel %vm328, %v289, 0
  %v345 = vsel %vm328, %v291, 0
  %v348 = vsel %vm328, %v293, 0
  %v351 = vsel %vm328, %v295, 0
  %353 = vmatprep.subr.mxu0 0.0
  %354 = vmatpush1.msra.mxu0 %v296
  %355 = vmatprep.subr.mxu0 0.0
  %356 = vmatpush1.msra.mxu0 %v297
  %357 = vmatprep.subr.mxu0 0.0
  %358 = vmatpush1.msra.mxu0 %v298
  %359 = vmatprep.subr.mxu0 0.0
  %360 = vmatpush1.msra.mxu0 %v299
  %361 = vmatprep.subr.mxu0 0.0
  %362 = vmatpush1.msra.mxu0 %v300
  %363 = vmatprep.subr.mxu0 0.0
  %364 = vmatpush1.msra.mxu0 %v301
  %365 = vmatprep.subr.mxu0 0.0
  %366 = vmatpush1.msra.mxu0 %v302
  %367 = vmatprep.subr.mxu0 0.0
  %368 = vmatpush1.msra.mxu0 %v303
  %369 = vmatprep.subr.mxu0 0.0
  %370 = vmatpush1.msra.mxu0 %v304
  %371 = vmatprep.subr.mxu0 0.0
  %372 = vmatpush1.msra.mxu0 %v305
  %373 = vmatprep.subr.mxu0 0.0
  %374 = vmatpush1.msra.mxu0 %v306
  %375 = vmatprep.subr.mxu0 0.0
  %376 = vmatpush1.msra.mxu0 %v307
  %377 = vmatprep.subr.mxu0 0.0
  %378 = vmatpush1.msra.mxu0 %v308
  %379 = vmatprep.subr.mxu0 0.0
  %380 = vmatpush1.msra.mxu0 %v309
  %381 = vmatprep.subr.mxu0 0.0
  %382 = vmatpush1.msra.mxu0 %v310
  %383 = vmatprep.subr.mxu0 0.0
  %384 = vmatpush1.msra.mxu0 %v311
  %385 = vmatprep.subr.mxu0 0.0
  %386 = vmatpush1.msra.mxu0 %v312
  %387 = vmatprep.subr.mxu0 0.0
  %388 = vmatpush1.msra.mxu0 %v313
  %389 = vmatprep.subr.mxu0 0.0
  %390 = vmatpush1.msra.mxu0 %v314
  %391 = vmatprep.subr.mxu0 0.0
  %392 = vmatpush1.msra.mxu0 %v315
  %393 = vmatprep.subr.mxu0 0.0
  %394 = vmatpush1.msra.mxu0 %v316
  %395 = vmatprep.subr.mxu0 0.0
  %396 = vmatpush1.msra.mxu0 %v317
  %397 = vmatprep.subr.mxu0 0.0
  %398 = vmatpush1.msra.mxu0 %v318
  %399 = vmatprep.subr.mxu0 0.0
  %400 = vmatpush1.msra.mxu0 %v319
  %401 = vmatprep.subr.mxu0 0.0
  %402 = vmatpush1.msra.mxu0 %v320
  %403 = vmatprep.subr.mxu0 0.0
  %404 = vmatpush1.msra.mxu0 0.0
  %405 = vmatprep.subr.mxu0 0.0
  %406 = vmatpush1.msra.mxu0 0.0
  %407 = vmatprep.subr.mxu0 0.0
  %408 = vmatpush1.msra.mxu0 0.0
  %409 = vmatprep.subr.mxu0 0.0
  %410 = vmatpush1.msra.mxu0 0.0
  %411 = vmatprep.subr.mxu0 0.0
  %412 = vmatpush1.msra.mxu0 0.0
  %413 = vmatprep.subr.mxu0 0.0
  %414 = vmatpush1.msra.mxu0 0.0
  %415 = vmatprep.subr.mxu0 0.0
  %416 = vmatpush1.msra.mxu0 0.0
  %417 = vmatprep.mubr.f32.mxu0 %v330
  %418 = vmatmul.mubr.f32.gmra.mrb[0].mxu0 %v280
  %v419 = vpop.f32.mrb[0].mxu0
  %v420 = vadd.f32 %v326, %v419
  %v421 = vpop.f32.mrb[0].mxu0
  %422 = vmatprep.mubr.f32.mxu0 %v333
  %423 = vmatmul.mubr.f32.gmra.mrb[0].mxu0 %v282
  %v424 = vpop.f32.mrb[0].mxu0
  %v425 = vadd.f32 %v326, %v424
  %v426 = vpop.f32.mrb[0].mxu0
  %427 = vmatprep.mubr.f32.mxu0 %v336
  %428 = vmatmul.mubr.f32.gmra.mrb[0].mxu0 %v284
  %v429 = vpop.f32.mrb[0].mxu0
  %v430 = vadd.f32 %v326, %v429
  %v431 = vpop.f32.mrb[0].mxu0
  %432 = vmatprep.mubr.f32.mxu0 %v339
  %433 = vmatmul.mubr.f32.gmra.mrb[0].mxu0 %v286
  %v434 = vpop.f32.mrb[0].mxu0
  %v435 = vadd.f32 %v326, %v434
  %v436 = vpop.f32.mrb[0].mxu0
  %437 = vmatprep.mubr.f32.mxu0 %v342
  %438 = vmatmul.mubr.f32.gmra.mrb[0].mxu0 %v288
  %v439 = vpop.f32.mrb[0].mxu0
  %v440 = vadd.f32 %v326, %v439
  %v441 = vpop.f32.mrb[0].mxu0
  %442 = vmatprep.mubr.f32.mxu0 %v345
  %443 = vmatmul.mubr.f32.gmra.mrb[0].mxu0 %v290
  %v444 = vpop.f32.mrb[0].mxu0
  %v445 = vadd.f32 %v326, %v444
  %v446 = vpop.f32.mrb[0].mxu0
  %447 = vmatprep.mubr.f32.mxu0 %v348
  %448 = vmatmul.mubr.f32.gmra.mrb[0].mxu0 %v292
  %v449 = vpop.f32.mrb[0].mxu0
  %v450 = vadd.f32 %v326, %v449
  %v451 = vpop.f32.mrb[0].mxu0
  %452 = vmatprep.mubr.f32.mxu0 %v351
  %453 = vmatmul.mubr.f32.gmra.mrb[0].mxu0 %v294
  %v454 = vpop.f32.mrb[0].mxu0
  %v455 = vadd.f32 %v326, %v454
  %v456 = vpop.f32.mrb[0].mxu0
  %457 = vdwg.mxu0
  %vm458 = vcmp.gt.f32.partialorder %v420, 0.0
  %vm459 = vcmp.gt.f32.partialorder %v425, 0.0
  %vm460 = vcmp.gt.f32.partialorder %v430, 0.0
  %vm461 = vcmp.gt.f32.partialorder %v435, 0.0
  %vm462 = vcmp.gt.f32.partialorder %v440, 0.0
  %vm463 = vcmp.gt.f32.partialorder %v445, 0.0
  %vm464 = vcmp.gt.f32.partialorder %v450, 0.0
  %vm465 = vcmp.gt.f32.partialorder %v455, 0.0
  %v466 = vmin.f32 %v420, 0.0
  %v467 = vmin.f32 %v425, 0.0
  %v468 = vmin.f32 %v430, 0.0
  %v469 = vmin.f32 %v435, 0.0
  %v470 = vmin.f32 %v440, 0.0
  %v471 = vmin.f32 %v445, 0.0
  %v472 = vmin.f32 %v450, 0.0
  %v473 = vmin.f32 %v455, 0.0
  %v474 = vmul.f32 %v466, 1.442695
  %v475 = vpow.pop %v474
  %v476 = vmul.f32 %v467, 1.442695
  %v477 = vpow.pop %v476
  %v478 = vmul.f32 %v468, 1.442695
  %v479 = vpow.pop %v478
  %v480 = vmul.f32 %v469, 1.442695
  %v481 = vpow.pop %v480
  %v482 = vmul.f32 %v470, 1.442695
  %v483 = vpow.pop %v482
  %v484 = vmul.f32 %v471, 1.442695
  %v485 = vpow.pop %v484
  %v486 = vmul.f32 %v472, 1.442695
  %v487 = vpow.pop %v486
  %v488 = vmul.f32 %v473, 1.442695
  %v489 = vpow.pop %v488
  %v490 = vsub.f32 %v475, 1.0
  %v491 = vsub.f32 %v477, 1.0
  %v492 = vsub.f32 %v479, 1.0
  %v493 = vsub.f32 %v481, 1.0
  %v494 = vsub.f32 %v483, 1.0
  %v495 = vsub.f32 %v485, 1.0
  %v496 = vsub.f32 %v487, 1.0
  %v497 = vsub.f32 %v489, 1.0
  %v498 = vsel %vm458, %v420, %v490
  %v499 = vsel %vm459, %v425, %v491
  %v500 = vsel %vm460, %v430, %v492
  %v501 = vsel %vm461, %v435, %v493
  %v502 = vsel %vm462, %v440, %v494
  %v503 = vsel %vm463, %v445, %v495
  %v504 = vsel %vm464, %v450, %v496
  %v505 = vsel %vm465, %v455, %v497
  %v506 = vld [vmem:[%s5] sm:$0xff]
  %v507 = vld [vmem:[%s5 + $0x8] sm:$0xff]
  %v508 = vld [vmem:[%s5 + $0x10] sm:$0xff]
  %v509 = vld [vmem:[%s5 + $0x18] sm:$0xff]
  %v510 = vld [vmem:[%s5 + $0x20] sm:$0xff]
  %v511 = vld [vmem:[%s5 + $0x28] sm:$0xff]
  %v512 = vld [vmem:[%s5 + $0x30] sm:$0xff]
  %v513 = vld [vmem:[%s5 + $0x38] sm:$0xff]
  %v514 = vld [vmem:[%s5 + $0x40] sm:$0xff]
  %v515 = vld [vmem:[%s5 + $0x48] sm:$0xff]
  %v516 = vld [vmem:[%s5 + $0x50] sm:$0xff]
  %v517 = vld [vmem:[%s5 + $0x58] sm:$0xff]
  %v518 = vld [vmem:[%s5 + $0x60] sm:$0xf]
  %v519 = vld [vmem:[%s6] sm:$0x1]
  %v521 = vlaneseq
  %v522 = vshrl.u32 %v521, 7
  %v523 = vsub.s32 0, %v522
  %v524 = vrot.slane %v519, %v523
  %vm526 = vcmask 818176
  %v528 = vsel %vm526, %v498, 0
  %v531 = vsel %vm526, %v499, 0
  %v534 = vsel %vm526, %v500, 0
  %v537 = vsel %vm526, %v501, 0
  %v540 = vsel %vm526, %v502, 0
  %v543 = vsel %vm526, %v503, 0
  %v546 = vsel %vm526, %v504, 0
  %v549 = vsel %vm526, %v505, 0
  %vm551 = vcmask 1043456
  %v553 = vsel %vm551, %v518, 0
  %555 = vmatprep.subr.mxu0 0.0
  %556 = vmatpush1.msra.mxu0 %v506
  %557 = vmatprep.subr.mxu0 0.0
  %558 = vmatpush1.msra.mxu0 %v507
  %559 = vmatprep.subr.mxu0 0.0
  %560 = vmatpush1.msra.mxu0 %v508
  %561 = vmatprep.subr.mxu0 0.0
  %562 = vmatpush1.msra.mxu0 %v509
  %563 = vmatprep.subr.mxu0 0.0
  %564 = vmatpush1.msra.mxu0 %v510
  %565 = vmatprep.subr.mxu0 0.0
  %566 = vmatpush1.msra.mxu0 %v511
  %567 = vmatprep.subr.mxu0 0.0
  %568 = vmatpush1.msra.mxu0 %v512
  %569 = vmatprep.subr.mxu0 0.0
  %570 = vmatpush1.msra.mxu0 %v513
  %571 = vmatprep.subr.mxu0 0.0
  %572 = vmatpush1.msra.mxu0 %v514
  %573 = vmatprep.subr.mxu0 0.0
  %574 = vmatpush1.msra.mxu0 %v515
  %575 = vmatprep.subr.mxu0 0.0
  %576 = vmatpush1.msra.mxu0 %v516
  %577 = vmatprep.subr.mxu0 0.0
  %578 = vmatpush1.msra.mxu0 %v517
  %579 = vmatprep.subr.mxu0 0.0
  %580 = vmatpush1.msra.mxu0 %v553
  %581 = vmatprep.subr.mxu0 0.0
  %582 = vmatpush1.msra.mxu0 0.0
  %583 = vmatprep.subr.mxu0 0.0
  %584 = vmatpush1.msra.mxu0 0.0
  %585 = vmatprep.subr.mxu0 0.0
  %586 = vmatpush1.msra.mxu0 0.0
  %587 = vmatprep.subr.mxu0 0.0
  %588 = vmatpush1.msra.mxu0 0.0
  %589 = vmatprep.subr.mxu0 0.0
  %590 = vmatpush1.msra.mxu0 0.0
  %591 = vmatprep.subr.mxu0 0.0
  %592 = vmatpush1.msra.mxu0 0.0
  %593 = vmatprep.subr.mxu0 0.0
  %594 = vmatpush1.msra.mxu0 0.0
  %595 = vmatprep.subr.mxu0 0.0
  %596 = vmatpush1.msra.mxu0 0.0
  %597 = vmatprep.subr.mxu0 0.0
  %598 = vmatpush1.msra.mxu0 0.0
  %599 = vmatprep.subr.mxu0 0.0
  %600 = vmatpush1.msra.mxu0 0.0
  %601 = vmatprep.subr.mxu0 0.0
  %602 = vmatpush1.msra.mxu0 0.0
  %603 = vmatprep.subr.mxu0 0.0
  %604 = vmatpush1.msra.mxu0 0.0
  %605 = vmatprep.subr.mxu0 0.0
  %606 = vmatpush1.msra.mxu0 0.0
  %607 = vmatprep.subr.mxu0 0.0
  %608 = vmatpush1.msra.mxu0 0.0
  %609 = vmatprep.subr.mxu0 0.0
  %610 = vmatpush1.msra.mxu0 0.0
  %611 = vmatprep.subr.mxu0 0.0
  %612 = vmatpush1.msra.mxu0 0.0
  %613 = vmatprep.subr.mxu0 0.0
  %614 = vmatpush1.msra.mxu0 0.0
  %615 = vmatprep.subr.mxu0 0.0
  %616 = vmatpush1.msra.mxu0 0.0
  %617 = vmatprep.subr.mxu0 0.0
  %618 = vmatpush1.msra.mxu0 0.0
  %619 = vmatprep.mubr.f32.mxu0 0.0
  %620 = vmatmul.mubr.f32.gmra.mrb[0].mxu0 %v528
  %v621 = vpop.f32.mrb[0].mxu0
  %v622 = vadd.f32 %v524, %v621
  %v623 = vpop.f32.mrb[0].mxu0
  %624 = vmatprep.mubr.f32.mxu0 0.0
  %625 = vmatmul.mubr.f32.gmra.mrb[0].mxu0 %v531
  %v626 = vpop.f32.mrb[0].mxu0
  %v627 = vadd.f32 %v524, %v626
  %v628 = vpop.f32.mrb[0].mxu0
  %629 = vmatprep.mubr.f32.mxu0 0.0
  %630 = vmatmul.mubr.f32.gmra.mrb[0].mxu0 %v534
  %v631 = vpop.f32.mrb[0].mxu0
  %v632 = vadd.f32 %v524, %v631
  %v633 = vpop.f32.mrb[0].mxu0
  %634 = vmatprep.mubr.f32.mxu0 0.0
  %635 = vmatmul.mubr.f32.gmra.mrb[0].mxu0 %v537
  %v636 = vpop.f32.mrb[0].mxu0
  %v637 = vadd.f32 %v524, %v636
  %v638 = vpop.f32.mrb[0].mxu0
  %639 = vmatprep.mubr.f32.mxu0 0.0
  %640 = vmatmul.mubr.f32.gmra.mrb[0].mxu0 %v540
  %v641 = vpop.f32.mrb[0].mxu0
  %v642 = vadd.f32 %v524, %v641
  %v643 = vpop.f32.mrb[0].mxu0
  %644 = vmatprep.mubr.f32.mxu0 0.0
  %645 = vmatmul.mubr.f32.gmra.mrb[0].mxu0 %v543
  %v646 = vpop.f32.mrb[0].mxu0
  %v647 = vadd.f32 %v524, %v646
  %v648 = vpop.f32.mrb[0].mxu0
  %649 = vmatprep.mubr.f32.mxu0 0.0
  %650 = vmatmul.mubr.f32.gmra.mrb[0].mxu0 %v546
  %v651 = vpop.f32.mrb[0].mxu0
  %v652 = vadd.f32 %v524, %v651
  %v653 = vpop.f32.mrb[0].mxu0
  %654 = vmatprep.mubr.f32.mxu0 0.0
  %655 = vmatmul.mubr.f32.gmra.mrb[0].mxu0 %v549
  %v656 = vpop.f32.mrb[0].mxu0
  %v657 = vadd.f32 %v524, %v656
  %v658 = vpop.f32.mrb[0].mxu0
  %659 = vdwg.mxu0
  %vm660 = vcmp.gt.f32.partialorder %v622, 0.0
  %vm661 = vcmp.gt.f32.partialorder %v627, 0.0
  %vm662 = vcmp.gt.f32.partialorder %v632, 0.0
  %vm663 = vcmp.gt.f32.partialorder %v637, 0.0
  %vm664 = vcmp.gt.f32.partialorder %v642, 0.0
  %vm665 = vcmp.gt.f32.partialorder %v647, 0.0
  %vm666 = vcmp.gt.f32.partialorder %v652, 0.0
  %vm667 = vcmp.gt.f32.partialorder %v657, 0.0
  %v668 = vmin.f32 %v622, 0.0
  %v669 = vmin.f32 %v627, 0.0
  %v670 = vmin.f32 %v632, 0.0
  %v671 = vmin.f32 %v637, 0.0
  %v672 = vmin.f32 %v642, 0.0
  %v673 = vmin.f32 %v647, 0.0
  %v674 = vmin.f32 %v652, 0.0
  %v675 = vmin.f32 %v657, 0.0
  %v676 = vmul.f32 %v668, 1.442695
  %v677 = vpow.pop %v676
  %v678 = vmul.f32 %v669, 1.442695
  %v679 = vpow.pop %v678
  %v680 = vmul.f32 %v670, 1.442695
  %v681 = vpow.pop %v680
  %v682 = vmul.f32 %v671, 1.442695
  %v683 = vpow.pop %v682
  %v684 = vmul.f32 %v672, 1.442695
  %v685 = vpow.pop %v684
  %v686 = vmul.f32 %v673, 1.442695
  %v687 = vpow.pop %v686
  %v688 = vmul.f32 %v674, 1.442695
  %v689 = vpow.pop %v688
  %v690 = vmul.f32 %v675, 1.442695
  %v691 = vpow.pop %v690
  %v692 = vsub.f32 %v677, 1.0
  %v693 = vsub.f32 %v679, 1.0
  %v694 = vsub.f32 %v681, 1.0
  %v695 = vsub.f32 %v683, 1.0
  %v696 = vsub.f32 %v685, 1.0
  %v697 = vsub.f32 %v687, 1.0
  %v698 = vsub.f32 %v689, 1.0
  %v699 = vsub.f32 %v691, 1.0
  %v700 = vsel %vm660, %v622, %v692
  %v701 = vsel %vm661, %v627, %v693
  %v702 = vsel %vm662, %v632, %v694
  %v703 = vsel %vm663, %v637, %v695
  %v704 = vsel %vm664, %v642, %v696
  %v705 = vsel %vm665, %v647, %v697
  %v706 = vsel %vm666, %v652, %v698
  %v707 = vsel %vm667, %v657, %v699
  %v708 = vld [vmem:[%s7] sm:$0xff]
  %v709 = vld [vmem:[%s7 + $0x8] sm:$0xff]
  %v710 = vld [vmem:[%s7 + $0x10] sm:$0xff]
  %v711 = vld [vmem:[%s7 + $0x18] sm:$0xff]
  %v712 = vld [vmem:[%s7 + $0x20] sm:$0xff]
  %v713 = vld [vmem:[%s7 + $0x28] sm:$0xff]
  %v714 = vld [vmem:[%s7 + $0x30] sm:$0x3]
  %v715 = vld [vmem:[%s8] sm:$0x1]
  %v717 = vlaneseq
  %v718 = vshrl.u32 %v717, 7
  %v719 = vsub.s32 0, %v718
  %v720 = vrot.slane %v715, %v719
  %vm722 = vcmask 408576
  %v724 = vsel %vm722, %v700, 0
  %v727 = vsel %vm722, %v701, 0
  %v730 = vsel %vm722, %v702, 0
  %v733 = vsel %vm722, %v703, 0
  %v736 = vsel %vm722, %v704, 0
  %v739 = vsel %vm722, %v705, 0
  %v742 = vsel %vm722, %v706, 0
  %v745 = vsel %vm722, %v707, 0
  %vm747 = vcmask 1041408
  %v749 = vsel %vm747, %v714, 0
  %751 = vmatprep.subr.mxu0 0.0
  %752 = vmatpush1.msra.mxu0 %v708
  %753 = vmatprep.subr.mxu0 0.0
  %754 = vmatpush1.msra.mxu0 %v709
  %755 = vmatprep.subr.mxu0 0.0
  %756 = vmatpush1.msra.mxu0 %v710
  %757 = vmatprep.subr.mxu0 0.0
  %758 = vmatpush1.msra.mxu0 %v711
  %759 = vmatprep.subr.mxu0 0.0
  %760 = vmatpush1.msra.mxu0 %v712
  %761 = vmatprep.subr.mxu0 0.0
  %762 = vmatpush1.msra.mxu0 %v713
  %763 = vmatprep.subr.mxu0 0.0
  %764 = vmatpush1.msra.mxu0 %v749
  %765 = vmatprep.subr.mxu0 0.0
  %766 = vmatpush1.msra.mxu0 0.0
  %767 = vmatprep.subr.mxu0 0.0
  %768 = vmatpush1.msra.mxu0 0.0
  %769 = vmatprep.subr.mxu0 0.0
  %770 = vmatpush1.msra.mxu0 0.0
  %771 = vmatprep.subr.mxu0 0.0
  %772 = vmatpush1.msra.mxu0 0.0
  %773 = vmatprep.subr.mxu0 0.0
  %774 = vmatpush1.msra.mxu0 0.0
  %775 = vmatprep.subr.mxu0 0.0
  %776 = vmatpush1.msra.mxu0 0.0
  %777 = vmatprep.subr.mxu0 0.0
  %778 = vmatpush1.msra.mxu0 0.0
  %779 = vmatprep.subr.mxu0 0.0
  %780 = vmatpush1.msra.mxu0 0.0
  %781 = vmatprep.subr.mxu0 0.0
  %782 = vmatpush1.msra.mxu0 0.0
  %783 = vmatprep.subr.mxu0 0.0
  %784 = vmatpush1.msra.mxu0 0.0
  %785 = vmatprep.subr.mxu0 0.0
  %786 = vmatpush1.msra.mxu0 0.0
  %787 = vmatprep.subr.mxu0 0.0
  %788 = vmatpush1.msra.mxu0 0.0
  %789 = vmatprep.subr.mxu0 0.0
  %790 = vmatpush1.msra.mxu0 0.0
  %791 = vmatprep.subr.mxu0 0.0
  %792 = vmatpush1.msra.mxu0 0.0
  %793 = vmatprep.subr.mxu0 0.0
  %794 = vmatpush1.msra.mxu0 0.0
  %795 = vmatprep.subr.mxu0 0.0
  %796 = vmatpush1.msra.mxu0 0.0
  %797 = vmatprep.subr.mxu0 0.0
  %798 = vmatpush1.msra.mxu0 0.0
  %799 = vmatprep.subr.mxu0 0.0
  %800 = vmatpush1.msra.mxu0 0.0
  %801 = vmatprep.subr.mxu0 0.0
  %802 = vmatpush1.msra.mxu0 0.0
  %803 = vmatprep.subr.mxu0 0.0
  %804 = vmatpush1.msra.mxu0 0.0
  %805 = vmatprep.subr.mxu0 0.0
  %806 = vmatpush1.msra.mxu0 0.0
  %807 = vmatprep.subr.mxu0 0.0
  %808 = vmatpush1.msra.mxu0 0.0
  %809 = vmatprep.subr.mxu0 0.0
  %810 = vmatpush1.msra.mxu0 0.0
  %811 = vmatprep.subr.mxu0 0.0
  %812 = vmatpush1.msra.mxu0 0.0
  %813 = vmatprep.subr.mxu0 0.0
  %814 = vmatpush1.msra.mxu0 0.0
  %815 = vmatprep.mubr.f32.mxu0 0.0
  %816 = vmatmul.mubr.f32.gmra.mrb[0].mxu0 %v724
  %v817 = vpop.f32.mrb[0].mxu0
  %v818 = vadd.f32 %v720, %v817
  %v819 = vpop.f32.mrb[0].mxu0
  %820 = vmatprep.mubr.f32.mxu0 0.0
  %821 = vmatmul.mubr.f32.gmra.mrb[0].mxu0 %v727
  %v822 = vpop.f32.mrb[0].mxu0
  %v823 = vadd.f32 %v720, %v822
  %v824 = vpop.f32.mrb[0].mxu0
  %825 = vmatprep.mubr.f32.mxu0 0.0
  %826 = vmatmul.mubr.f32.gmra.mrb[0].mxu0 %v730
  %v827 = vpop.f32.mrb[0].mxu0
  %v828 = vadd.f32 %v720, %v827
  %v829 = vpop.f32.mrb[0].mxu0
  %830 = vmatprep.mubr.f32.mxu0 0.0
  %831 = vmatmul.mubr.f32.gmra.mrb[0].mxu0 %v733
  %v832 = vpop.f32.mrb[0].mxu0
  %v833 = vadd.f32 %v720, %v832
  %v834 = vpop.f32.mrb[0].mxu0
  %835 = vmatprep.mubr.f32.mxu0 0.0
  %836 = vmatmul.mubr.f32.gmra.mrb[0].mxu0 %v736
  %v837 = vpop.f32.mrb[0].mxu0
  %v838 = vadd.f32 %v720, %v837
  %v839 = vpop.f32.mrb[0].mxu0
  %840 = vmatprep.mubr.f32.mxu0 0.0
  %841 = vmatmul.mubr.f32.gmra.mrb[0].mxu0 %v739
  %v842 = vpop.f32.mrb[0].mxu0
  %v843 = vadd.f32 %v720, %v842
  %v844 = vpop.f32.mrb[0].mxu0
  %845 = vmatprep.mubr.f32.mxu0 0.0
  %846 = vmatmul.mubr.f32.gmra.mrb[0].mxu0 %v742
  %v847 = vpop.f32.mrb[0].mxu0
  %v848 = vadd.f32 %v720, %v847
  %v849 = vpop.f32.mrb[0].mxu0
  %850 = vmatprep.mubr.f32.mxu0 0.0
  %851 = vmatmul.mubr.f32.gmra.mrb[0].mxu0 %v745
  %v852 = vpop.f32.mrb[0].mxu0
  %v853 = vadd.f32 %v720, %v852
  %v854 = vpop.f32.mrb[0].mxu0
  %855 = vdwg.mxu0
  %vm856 = vcmp.gt.f32.partialorder %v818, 0.0
  %vm857 = vcmp.gt.f32.partialorder %v823, 0.0
  %vm858 = vcmp.gt.f32.partialorder %v828, 0.0
  %vm859 = vcmp.gt.f32.partialorder %v833, 0.0
  %vm860 = vcmp.gt.f32.partialorder %v838, 0.0
  %vm861 = vcmp.gt.f32.partialorder %v843, 0.0
  %vm862 = vcmp.gt.f32.partialorder %v848, 0.0
  %vm863 = vcmp.gt.f32.partialorder %v853, 0.0
  %v864 = vmin.f32 %v818, 0.0
  %v865 = vmin.f32 %v823, 0.0
  %v866 = vmin.f32 %v828, 0.0
  %v867 = vmin.f32 %v833, 0.0
  %v868 = vmin.f32 %v838, 0.0
  %v869 = vmin.f32 %v843, 0.0
  %v870 = vmin.f32 %v848, 0.0
  %v871 = vmin.f32 %v853, 0.0
  %v872 = vmul.f32 %v864, 1.442695
  %v873 = vpow.pop %v872
  %v874 = vmul.f32 %v865, 1.442695
  %v875 = vpow.pop %v874
  %v876 = vmul.f32 %v866, 1.442695
  %v877 = vpow.pop %v876
  %v878 = vmul.f32 %v867, 1.442695
  %v879 = vpow.pop %v878
  %v880 = vmul.f32 %v868, 1.442695
  %v881 = vpow.pop %v880
  %v882 = vmul.f32 %v869, 1.442695
  %v883 = vpow.pop %v882
  %v884 = vmul.f32 %v870, 1.442695
  %v885 = vpow.pop %v884
  %v886 = vmul.f32 %v871, 1.442695
  %v887 = vpow.pop %v886
  %v888 = vsub.f32 %v873, 1.0
  %v889 = vsub.f32 %v875, 1.0
  %v890 = vsub.f32 %v877, 1.0
  %v891 = vsub.f32 %v879, 1.0
  %v892 = vsub.f32 %v881, 1.0
  %v893 = vsub.f32 %v883, 1.0
  %v894 = vsub.f32 %v885, 1.0
  %v895 = vsub.f32 %v887, 1.0
  %v896 = vsel %vm856, %v818, %v888
  %v897 = vsel %vm857, %v823, %v889
  %v898 = vsel %vm858, %v828, %v890
  %v899 = vsel %vm859, %v833, %v891
  %v900 = vsel %vm860, %v838, %v892
  %v901 = vsel %vm861, %v843, %v893
  %v902 = vsel %vm862, %v848, %v894
  %v903 = vsel %vm863, %v853, %v895
  %v904 = vld [vmem:[%s9] sm:$0xff]
  %v905 = vld [vmem:[%s9 + $0x8] sm:$0xff]
  %v906 = vld [vmem:[%s9 + $0x10] sm:$0xf]
  %v907 = vld [vmem:[%s10] sm:$0x1]
  %v909 = vlaneseq
  %v910 = vshrl.u32 %v909, 7
  %v911 = vsub.s32 0, %v910
  %v912 = vrot.slane %v907, %v911
  %vm914 = vcmask 162816
  %v916 = vsel %vm914, %v896, 0
  %v919 = vsel %vm914, %v897, 0
  %v922 = vsel %vm914, %v898, 0
  %v925 = vsel %vm914, %v899, 0
  %v928 = vsel %vm914, %v900, 0
  %v931 = vsel %vm914, %v901, 0
  %v934 = vsel %vm914, %v902, 0
  %v937 = vsel %vm914, %v903, 0
  %v940 = vsel %vm551, %v906, 0
  %942 = vmatprep.subr.mxu0 0.0
  %943 = vmatpush1.msra.mxu0 %v904
  %944 = vmatprep.subr.mxu0 0.0
  %945 = vmatpush1.msra.mxu0 %v905
  %946 = vmatprep.subr.mxu0 0.0
  %947 = vmatpush1.msra.mxu0 %v940
  %948 = vmatprep.subr.mxu0 0.0
  %949 = vmatpush1.msra.mxu0 0.0
  %950 = vmatprep.subr.mxu0 0.0
  %951 = vmatpush1.msra.mxu0 0.0
  %952 = vmatprep.subr.mxu0 0.0
  %953 = vmatpush1.msra.mxu0 0.0
  %954 = vmatprep.subr.mxu0 0.0
  %955 = vmatpush1.msra.mxu0 0.0
  %956 = vmatprep.subr.mxu0 0.0
  %957 = vmatpush1.msra.mxu0 0.0
  %958 = vmatprep.subr.mxu0 0.0
  %959 = vmatpush1.msra.mxu0 0.0
  %960 = vmatprep.subr.mxu0 0.0
  %961 = vmatpush1.msra.mxu0 0.0
  %962 = vmatprep.subr.mxu0 0.0
  %963 = vmatpush1.msra.mxu0 0.0
  %964 = vmatprep.subr.mxu0 0.0
  %965 = vmatpush1.msra.mxu0 0.0
  %966 = vmatprep.subr.mxu0 0.0
  %967 = vmatpush1.msra.mxu0 0.0
  %968 = vmatprep.subr.mxu0 0.0
  %969 = vmatpush1.msra.mxu0 0.0
  %970 = vmatprep.subr.mxu0 0.0
  %971 = vmatpush1.msra.mxu0 0.0
  %972 = vmatprep.subr.mxu0 0.0
  %973 = vmatpush1.msra.mxu0 0.0
  %974 = vmatprep.subr.mxu0 0.0
  %975 = vmatpush1.msra.mxu0 0.0
  %976 = vmatprep.subr.mxu0 0.0
  %977 = vmatpush1.msra.mxu0 0.0
  %978 = vmatprep.subr.mxu0 0.0
  %979 = vmatpush1.msra.mxu0 0.0
  %980 = vmatprep.subr.mxu0 0.0
  %981 = vmatpush1.msra.mxu0 0.0
  %982 = vmatprep.subr.mxu0 0.0
  %983 = vmatpush1.msra.mxu0 0.0
  %984 = vmatprep.subr.mxu0 0.0
  %985 = vmatpush1.msra.mxu0 0.0
  %986 = vmatprep.subr.mxu0 0.0
  %987 = vmatpush1.msra.mxu0 0.0
  %988 = vmatprep.subr.mxu0 0.0
  %989 = vmatpush1.msra.mxu0 0.0
  %990 = vmatprep.subr.mxu0 0.0
  %991 = vmatpush1.msra.mxu0 0.0
  %992 = vmatprep.subr.mxu0 0.0
  %993 = vmatpush1.msra.mxu0 0.0
  %994 = vmatprep.subr.mxu0 0.0
  %995 = vmatpush1.msra.mxu0 0.0
  %996 = vmatprep.subr.mxu0 0.0
  %997 = vmatpush1.msra.mxu0 0.0
  %998 = vmatprep.subr.mxu0 0.0
  %999 = vmatpush1.msra.mxu0 0.0
  %1000 = vmatprep.subr.mxu0 0.0
  %1001 = vmatpush1.msra.mxu0 0.0
  %1002 = vmatprep.subr.mxu0 0.0
  %1003 = vmatpush1.msra.mxu0 0.0
  %1004 = vmatprep.subr.mxu0 0.0
  %1005 = vmatpush1.msra.mxu0 0.0
  %1006 = vmatprep.mubr.f32.mxu0 0.0
  %1007 = vmatmul.mubr.f32.gmra.mrb[0].mxu0 %v916
  %v1008 = vpop.f32.mrb[0].mxu0
  %v1009 = vadd.f32 %v912, %v1008
  %v1010 = vpop.f32.mrb[0].mxu0
  %1011 = vmatprep.mubr.f32.mxu0 0.0
  %1012 = vmatmul.mubr.f32.gmra.mrb[0].mxu0 %v919
  %v1013 = vpop.f32.mrb[0].mxu0
  %v1014 = vadd.f32 %v912, %v1013
  %v1015 = vpop.f32.mrb[0].mxu0
  %1016 = vmatprep.mubr.f32.mxu0 0.0
  %1017 = vmatmul.mubr.f32.gmra.mrb[0].mxu0 %v922
  %v1018 = vpop.f32.mrb[0].mxu0
  %v1019 = vadd.f32 %v912, %v1018
  %v1020 = vpop.f32.mrb[0].mxu0
  %1021 = vmatprep.mubr.f32.mxu0 0.0
  %1022 = vmatmul.mubr.f32.gmra.mrb[0].mxu0 %v925
  %v1023 = vpop.f32.mrb[0].mxu0
  %v1024 = vadd.f32 %v912, %v1023
  %v1025 = vpop.f32.mrb[0].mxu0
  %1026 = vmatprep.mubr.f32.mxu0 0.0
  %1027 = vmatmul.mubr.f32.gmra.mrb[0].mxu0 %v928
  %v1028 = vpop.f32.mrb[0].mxu0
  %v1029 = vadd.f32 %v912, %v1028
  %v1030 = vpop.f32.mrb[0].mxu0
  %1031 = vmatprep.mubr.f32.mxu0 0.0
  %1032 = vmatmul.mubr.f32.gmra.mrb[0].mxu0 %v931
  %v1033 = vpop.f32.mrb[0].mxu0
  %v1034 = vadd.f32 %v912, %v1033
  %v1035 = vpop.f32.mrb[0].mxu0
  %1036 = vmatprep.mubr.f32.mxu0 0.0
  %1037 = vmatmul.mubr.f32.gmra.mrb[0].mxu0 %v934
  %v1038 = vpop.f32.mrb[0].mxu0
  %v1039 = vadd.f32 %v912, %v1038
  %v1040 = vpop.f32.mrb[0].mxu0
  %1041 = vmatprep.mubr.f32.mxu0 0.0
  %1042 = vmatmul.mubr.f32.gmra.mrb[0].mxu0 %v937
  %v1043 = vpop.f32.mrb[0].mxu0
  %v1044 = vadd.f32 %v912, %v1043
  %v1045 = vpop.f32.mrb[0].mxu0
  %1046 = vdwg.mxu0
  %1047 = vmax.xlane.f32.xlu0 %v1009
  %v1048 = vpop.xlane.xlu0 %1047
  %1049 = vmax.xlane.f32.xlu0 %v1014
  %v1050 = vpop.xlane.xlu0 %1049
  %1051 = vmax.xlane.f32.xlu0 %v1019
  %v1052 = vpop.xlane.xlu0 %1051
  %1053 = vmax.xlane.f32.xlu0 %v1024
  %v1054 = vpop.xlane.xlu0 %1053
  %1055 = vmax.xlane.f32.xlu0 %v1029
  %v1056 = vpop.xlane.xlu0 %1055
  %1057 = vmax.xlane.f32.xlu0 %v1034
  %v1058 = vpop.xlane.xlu0 %1057
  %1059 = vmax.xlane.f32.xlu0 %v1039
  %v1060 = vpop.xlane.xlu0 %1059
  %1061 = vmax.xlane.f32.xlu0 %v1044
  %v1062 = vpop.xlane.xlu0 %1061
  %v1063 = vsub.f32 %v1009, %v1048
  %v1064 = vsub.f32 %v1014, %v1050
  %v1065 = vsub.f32 %v1019, %v1052
  %v1066 = vsub.f32 %v1024, %v1054
  %v1067 = vsub.f32 %v1029, %v1056
  %v1068 = vsub.f32 %v1034, %v1058
  %v1069 = vsub.f32 %v1039, %v1060
  %v1070 = vsub.f32 %v1044, %v1062
  %v1071 = vmul.f32 %v1063, 1.442695
  %v1072 = vpow.pop %v1071
  %v1073 = vmul.f32 %v1064, 1.442695
  %v1074 = vpow.pop %v1073
  %v1075 = vmul.f32 %v1065, 1.442695
  %v1076 = vpow.pop %v1075
  %v1077 = vmul.f32 %v1066, 1.442695
  %v1078 = vpow.pop %v1077
  %v1079 = vmul.f32 %v1067, 1.442695
  %v1080 = vpow.pop %v1079
  %v1081 = vmul.f32 %v1068, 1.442695
  %v1082 = vpow.pop %v1081
  %v1083 = vmul.f32 %v1069, 1.442695
  %v1084 = vpow.pop %v1083
  %v1085 = vmul.f32 %v1070, 1.442695
  %v1086 = vpow.pop %v1085
  %1087 = vadd.xlane.f32.xlu0 %v1072
  %v1088 = vpop.xlane.xlu0 %1087
  %1089 = vadd.xlane.f32.xlu0 %v1074
  %v1090 = vpop.xlane.xlu0 %1089
  %1091 = vadd.xlane.f32.xlu0 %v1076
  %v1092 = vpop.xlane.xlu0 %1091
  %1093 = vadd.xlane.f32.xlu0 %v1078
  %v1094 = vpop.xlane.xlu0 %1093
  %1095 = vadd.xlane.f32.xlu0 %v1080
  %v1096 = vpop.xlane.xlu0 %1095
  %1097 = vadd.xlane.f32.xlu0 %v1082
  %v1098 = vpop.xlane.xlu0 %1097
  %1099 = vadd.xlane.f32.xlu0 %v1084
  %v1100 = vpop.xlane.xlu0 %1099
  %1101 = vadd.xlane.f32.xlu0 %v1086
  %v1102 = vpop.xlane.xlu0 %1101
  %v1103 = vrcp.pop %v1088
  %v1104 = vrcp.pop %v1090
  %v1105 = vrcp.pop %v1092
  %v1106 = vrcp.pop %v1094
  %v1107 = vrcp.pop %v1096
  %v1108 = vrcp.pop %v1098
  %v1109 = vrcp.pop %v1100
  %v1110 = vrcp.pop %v1102
  %v1111 = vmul.f32 %v1072, %v1103
  %v1112 = vmul.f32 %v1074, %v1104
  %v1113 = vmul.f32 %v1076, %v1105
  %v1114 = vmul.f32 %v1078, %v1106
  %v1115 = vmul.f32 %v1080, %v1107
  %v1116 = vmul.f32 %v1082, %v1108
  %v1117 = vmul.f32 %v1084, %v1109
  %v1118 = vmul.f32 %v1086, %v1110
  %1119 = vst [vmem:[%s11] sm:$0xff] %v1111
  %1120 = vst [vmem:[%s11 + $0x8] sm:$0xff] %v1112
  %1121 = vst [vmem:[%s11 + $0x10] sm:$0xff] %v1113
  %1122 = vst [vmem:[%s11 + $0x18] sm:$0xff] %v1114
  %1123 = vst [vmem:[%s11 + $0x20] sm:$0xff] %v1115
  %1124 = vst [vmem:[%s11 + $0x28] sm:$0xff] %v1116
  %1125 = vst [vmem:[%s11 + $0x30] sm:$0xff] %v1117
  %1126 = vst [vmem:[%s11 + $0x38] sm:$0xff] %v1118
  // Predicated region
  $region46: #{multimer_net_forward.1} parent=0 // pred_check
    _
  $region47: #{multimer_net_forward.1} parent=0 // pred_check_branch
    %1128 = sbr.rel (0) target = $region49
  $region48: #{multimer_net_forward.1} parent=0 // pred_region
    _
  $region49: #{multimer_net_forward.1} parent=0 // pred_fallthru
    _
  // Predicated region
  $region50: #{multimer_net_forward.1} parent=0 // pred_check
    _
  $region51: #{multimer_net_forward.1} parent=0 // pred_check_branch
    %1130 = sbr.rel (0) target = $region53
  $region52: #{multimer_net_forward.1} parent=0 // pred_region
    _
  $region53: #{multimer_net_forward.1} parent=0 // pred_fallthru
    _

</llo_original>
